<compile_context>
chip_gen: v7x
topology: tpu7x:2x2x1
jax: 0.10.0
libtpu: 0.0.40
codegen_flags: <defaults>
</compile_context>

<pallas_src>
import functools

import jax
import jax.numpy as jnp
from jax.experimental import pallas as pl
from jax.experimental.pallas import tpu as pltpu

HIDDEN = 256
LANE = 128


def _round_up(n, m):
    return ((n + m - 1) // m) * m


def _critic_kernel(x_ref, w1_ref, b1_ref, w2_ref, b2_ref,
                   w3_ref, b3_ref, w4_ref, b4_ref, out_ref):
    # fc1 + ReLU   (bf16 MXU operands, f32 accumulation, f32 epilogue)
    h = jnp.dot(x_ref[...], w1_ref[...], preferred_element_type=jnp.float32)
    h = jnp.maximum(h + b1_ref[...], 0.0)
    # fc2 + ReLU
    h = jnp.dot(h.astype(jnp.bfloat16), w2_ref[...],
                preferred_element_type=jnp.float32)
    h = jnp.maximum(h + b2_ref[...], 0.0)
    # fc3 + ReLU
    h = jnp.dot(h.astype(jnp.bfloat16), w3_ref[...],
                preferred_element_type=jnp.float32)
    h = jnp.maximum(h + b3_ref[...], 0.0)
    # q_out: 256 -> 1.  Done on VPU (mul) + XLU (lane reduce) instead of an N=1 MXU
    # pass; those VLIW slots are free while the MXU handles fc1-fc3.
    q = jnp.sum(h * w4_ref[...], axis=-1, keepdims=True)      # (block_b, 1) f32
    out_ref[...] = (q + b4_ref[...]).astype(out_ref.dtype)


@functools.partial(jax.jit, static_argnames=("block_b",))
def critic_forward(obs_goal, actions, params, action_max=1.0, *, block_b=256):
    """Fused Q-critic forward.

    obs_goal: (B, obs+goal) f32, actions: (B, action) f32 -> (B, 1) f32.
    Matches PyTorch: q = q_out(relu(fc3(relu(fc2(relu(fc1(cat[x, a/max_a])))))))
    """
    w1, b1, w2, b2, w3, b3, w4, b4 = params
    B = obs_goal.shape[0]
    in_dim = obs_goal.shape[1] + actions.shape[1]
    assert w1.shape == (in_dim, HIDDEN)
    assert block_b % LANE == 0

    # --- wrapper-side layout plumbing (cheap XLA ops) ------------------------------
    # torch.cat([x, actions / max_action], dim=1)
    x = jnp.concatenate([obs_goal, actions / action_max], axis=1)

    # pad features to a lane multiple; pad batch to a tile multiple (don't over-pad
    # tiny batches: shrink the tile to the rounded-up batch).
    k_pad = _round_up(in_dim, LANE)
    blk = min(block_b, _round_up(B, LANE))
    b_pad = _round_up(B, blk)
    x = jnp.pad(x, ((0, b_pad - B), (0, k_pad - in_dim))).astype(jnp.bfloat16)

    w1p = jnp.pad(w1, ((0, k_pad - in_dim), (0, 0))).astype(jnp.bfloat16)
    w2b = w2.astype(jnp.bfloat16)
    w3b = w3.astype(jnp.bfloat16)
    w4r = w4.reshape(1, HIDDEN)                  # (1, 256) f32 row for the VPU reduction

    grid = (b_pad // blk,)
    full = lambda a: pl.BlockSpec(a.shape, lambda i: (0,) * a.ndim)  # VMEM-resident

    out = pl.pallas_call(
        _critic_kernel,
        out_shape=jax.ShapeDtypeStruct((b_pad, 1), jnp.float32),
        grid_spec=pltpu.PrefetchScalarGridSpec(
            num_scalar_prefetch=0,
            grid=grid,
            in_specs=[
                pl.BlockSpec((blk, k_pad), lambda i: (i, 0)),   # x batch tile
                full(w1p), full(b1),
                full(w2b), full(b2),
                full(w3b), full(b3),
                full(w4r), full(b4),
            ],
            out_specs=pl.BlockSpec((blk, 1), lambda i: (i, 0)),
        ),
        compiler_params=pltpu.CompilerParams(
            dimension_semantics=("parallel",)),
    )(x, w1p, b1, w2b, b2, w3b, b3, w4r, b4)

    return out[:B]


def init_params(key, in_dim):
    """Deterministic init mimicking PyTorch nn.Linear default:
    U(-1/sqrt(fan_in), 1/sqrt(fan_in)) for both weight and bias.
    Weights stored pre-transposed as (in_features, out_features)."""
    dims = [(in_dim, HIDDEN), (HIDDEN, HIDDEN), (HIDDEN, HIDDEN), (HIDDEN, 1)]
    params = []
    for (fan_in, fan_out) in dims:
        key, kw, kb = jax.random.split(key, 3)
        bound = 1.0 / jnp.sqrt(fan_in)
        w = jax.random.uniform(kw, (fan_in, fan_out), jnp.float32, -bound, bound)
        b = jax.random.uniform(kb, (1, fan_out), jnp.float32, -bound, bound)
        params += [w, b]
    return tuple(params)


def reference_forward_f32(obs_goal, actions, params, action_max=1.0):
    w1, b1, w2, b2, w3, b3, w4, b4 = params
    x = jnp.concatenate([obs_goal, actions / action_max], axis=1)
    h = jnp.maximum(x @ w1 + b1, 0.0)
    h = jnp.maximum(h @ w2 + b2, 0.0)
    h = jnp.maximum(h @ w3 + b3, 0.0)
    return h @ w4 + b4


def reference_forward_bf16(obs_goal, actions, params, action_max=1.0):
    """Mirrors the kernel numerics: bf16 matmul operands, f32 accumulation/epilogue."""
    w1, b1, w2, b2, w3, b3, w4, b4 = params
    bf = jnp.bfloat16
    x = jnp.concatenate([obs_goal, actions / action_max], axis=1).astype(bf)
    h = jnp.maximum(jnp.dot(x, w1.astype(bf),
                            preferred_element_type=jnp.float32) + b1, 0.0)
    h = jnp.maximum(jnp.dot(h.astype(bf), w2.astype(bf),
                            preferred_element_type=jnp.float32) + b2, 0.0)
    h = jnp.maximum(jnp.dot(h.astype(bf), w3.astype(bf),
                            preferred_element_type=jnp.float32) + b3, 0.0)
    return h @ w4 + b4


if __name__ == "__main__":
    # Small, module-consistent shapes:
    # env_params = {'obs': 10, 'goal': 5, 'action': 4, 'action_max': 1.0}
    obs_dim, goal_dim, act_dim, action_max = 10, 5, 4, 1.0
    in_dim = obs_dim + goal_dim + act_dim
    batch = 8

    key = jax.random.PRNGKey(0)
    key, kx, ka = jax.random.split(key, 3)
    obs_goal = jax.random.normal(kx, (batch, obs_dim + goal_dim), jnp.float32)
    actions = action_max * jax.random.uniform(ka, (batch, act_dim), jnp.float32,
                                              -1.0, 1.0)

    params = init_params(jax.random.PRNGKey(0), in_dim)

    q = critic_forward(obs_goal, actions, params, action_max)
    q = jax.block_until_ready(q)

    q_bf = reference_forward_bf16(obs_goal, actions, params, action_max)
    q_f32 = reference_forward_f32(obs_goal, actions, params, action_max)

    assert q.shape == (batch, 1), q.shape
    assert jnp.allclose(q, q_bf, atol=1e-3, rtol=1e-3), "mismatch vs bf16-matched reference"
    assert jnp.allclose(q, q_f32, atol=5e-2, rtol=5e-2), "mismatch vs f32 reference"

    print("KERNEL_OK")
</pallas_src>

<mosaic_0001>
module attributes {stable_mosaic.version = 11 : i64} {
  func.func @_critic_kernel(%arg0: i32, %arg1: memref<128x128xbf16, #tpu.memory_space<vmem>>, %arg2: memref<128x256xbf16, #tpu.memory_space<vmem>>, %arg3: memref<1x256xf32, #tpu.memory_space<vmem>>, %arg4: memref<256x256xbf16, #tpu.memory_space<vmem>>, %arg5: memref<1x256xf32, #tpu.memory_space<vmem>>, %arg6: memref<256x256xbf16, #tpu.memory_space<vmem>>, %arg7: memref<1x256xf32, #tpu.memory_space<vmem>>, %arg8: memref<1x256xf32, #tpu.memory_space<vmem>>, %arg9: memref<1x1xf32, #tpu.memory_space<vmem>>, %arg10: memref<128x1xf32, #tpu.memory_space<vmem>>) attributes {dimension_semantics = [#tpu.dimension_semantics<parallel>], iteration_bounds = array<i64: 1>, scalar_prefetch = 0 : i64, scratch_operands = 0 : i64, tpu.core_type = #tpu.core_type<tc>, window_params = [{transform_indices = @transform_0, window_bounds = array<i64: 128, 128>}, {pipeline_mode = #tpu.pipeline_mode<synchronous>, transform_indices = @transform_1, window_bounds = array<i64: 128, 256>}, {pipeline_mode = #tpu.pipeline_mode<synchronous>, transform_indices = @transform_2, window_bounds = array<i64: 1, 256>}, {pipeline_mode = #tpu.pipeline_mode<synchronous>, transform_indices = @transform_3, window_bounds = array<i64: 256, 256>}, {pipeline_mode = #tpu.pipeline_mode<synchronous>, transform_indices = @transform_4, window_bounds = array<i64: 1, 256>}, {pipeline_mode = #tpu.pipeline_mode<synchronous>, transform_indices = @transform_5, window_bounds = array<i64: 256, 256>}, {pipeline_mode = #tpu.pipeline_mode<synchronous>, transform_indices = @transform_6, window_bounds = array<i64: 1, 256>}, {pipeline_mode = #tpu.pipeline_mode<synchronous>, transform_indices = @transform_7, window_bounds = array<i64: 1, 256>}, {pipeline_mode = #tpu.pipeline_mode<synchronous>, transform_indices = @transform_8, window_bounds = array<i64: 1, 1>}, {transform_indices = @transform_9, window_bounds = array<i64: 128, 1>}]} {
    %c0 = arith.constant 0 : index
    %c0_0 = arith.constant 0 : index
    %0 = vector.load %arg1[%c0, %c0_0] : memref<128x128xbf16, #tpu.memory_space<vmem>>, vector<128x128xbf16>
    %c0_1 = arith.constant 0 : index
    %c0_2 = arith.constant 0 : index
    %1 = vector.load %arg2[%c0_1, %c0_2] : memref<128x256xbf16, #tpu.memory_space<vmem>>, vector<128x256xbf16>
    %cst = arith.constant dense<0.000000e+00> : vector<128x256xf32>
    %2 = tpu.matmul %0, %1, %cst {dimension_numbers = #tpu.dot_dimension_numbers<[1], [0], [0], [1], [0, 0, 1, 1], [], []>} : vector<128x128xbf16>, vector<128x256xbf16>, vector<128x256xf32> -> vector<128x256xf32>
    %c0_3 = arith.constant 0 : index
    %c0_4 = arith.constant 0 : index
    %3 = vector.load %arg3[%c0_3, %c0_4] : memref<1x256xf32, #tpu.memory_space<vmem>>, vector<1x256xf32>
    %4 = vector.broadcast %3 : vector<1x256xf32> to vector<128x256xf32>
    %5 = arith.addf %2, %4 : vector<128x256xf32>
    %cst_5 = arith.constant 0.000000e+00 : f32
    %6 = vector.broadcast %cst_5 : f32 to vector<128x256xf32>
    %7 = arith.maximumf %5, %6 : vector<128x256xf32>
    %8 = arith.truncf %7 : vector<128x256xf32> to vector<128x256xbf16>
    %c0_6 = arith.constant 0 : index
    %c0_7 = arith.constant 0 : index
    %9 = vector.load %arg4[%c0_6, %c0_7] : memref<256x256xbf16, #tpu.memory_space<vmem>>, vector<256x256xbf16>
    %cst_8 = arith.constant dense<0.000000e+00> : vector<128x256xf32>
    %10 = tpu.matmul %8, %9, %cst_8 {dimension_numbers = #tpu.dot_dimension_numbers<[1], [0], [0], [1], [0, 0, 1, 1], [], []>} : vector<128x256xbf16>, vector<256x256xbf16>, vector<128x256xf32> -> vector<128x256xf32>
    %c0_9 = arith.constant 0 : index
    %c0_10 = arith.constant 0 : index
    %11 = vector.load %arg5[%c0_9, %c0_10] : memref<1x256xf32, #tpu.memory_space<vmem>>, vector<1x256xf32>
    %12 = vector.broadcast %11 : vector<1x256xf32> to vector<128x256xf32>
    %13 = arith.addf %10, %12 : vector<128x256xf32>
    %cst_11 = arith.constant 0.000000e+00 : f32
    %14 = vector.broadcast %cst_11 : f32 to vector<128x256xf32>
    %15 = arith.maximumf %13, %14 : vector<128x256xf32>
    %16 = arith.truncf %15 : vector<128x256xf32> to vector<128x256xbf16>
    %c0_12 = arith.constant 0 : index
    %c0_13 = arith.constant 0 : index
    %17 = vector.load %arg6[%c0_12, %c0_13] : memref<256x256xbf16, #tpu.memory_space<vmem>>, vector<256x256xbf16>
    %cst_14 = arith.constant dense<0.000000e+00> : vector<128x256xf32>
    %18 = tpu.matmul %16, %17, %cst_14 {dimension_numbers = #tpu.dot_dimension_numbers<[1], [0], [0], [1], [0, 0, 1, 1], [], []>} : vector<128x256xbf16>, vector<256x256xbf16>, vector<128x256xf32> -> vector<128x256xf32>
    %c0_15 = arith.constant 0 : index
    %c0_16 = arith.constant 0 : index
    %19 = vector.load %arg7[%c0_15, %c0_16] : memref<1x256xf32, #tpu.memory_space<vmem>>, vector<1x256xf32>
    %20 = vector.broadcast %19 : vector<1x256xf32> to vector<128x256xf32>
    %21 = arith.addf %18, %20 : vector<128x256xf32>
    %cst_17 = arith.constant 0.000000e+00 : f32
    %22 = vector.broadcast %cst_17 : f32 to vector<128x256xf32>
    %23 = arith.maximumf %21, %22 : vector<128x256xf32>
    %c0_18 = arith.constant 0 : index
    %c0_19 = arith.constant 0 : index
    %24 = vector.load %arg8[%c0_18, %c0_19] : memref<1x256xf32, #tpu.memory_space<vmem>>, vector<1x256xf32>
    %25 = vector.broadcast %24 : vector<1x256xf32> to vector<128x256xf32>
    %26 = arith.mulf %23, %25 : vector<128x256xf32>
    %cst_20 = arith.constant dense<0.000000e+00> : vector<128xf32>
    %27 = vector.multi_reduction <add>, %26, %cst_20 [1] : vector<128x256xf32> to vector<128xf32>
    %28 = vector.shape_cast %27 : vector<128xf32> to vector<128x1xf32>
    %c0_21 = arith.constant 0 : index
    %c0_22 = arith.constant 0 : index
    %29 = vector.load %arg9[%c0_21, %c0_22] : memref<1x1xf32, #tpu.memory_space<vmem>>, vector<1x1xf32>
    %30 = vector.broadcast %29 : vector<1x1xf32> to vector<128x1xf32>
    %31 = arith.addf %28, %30 : vector<128x1xf32>
    %c0_23 = arith.constant 0 : index
    %c0_24 = arith.constant 0 : index
    %32 = vector.load %arg10[%c0_23, %c0_24] : memref<128x1xf32, #tpu.memory_space<vmem>>, vector<128x1xf32>
    tpu.vector_store %arg10[%c0_23, %c0_24], %31 {strides = array<i32>} : memref<128x1xf32, #tpu.memory_space<vmem>>, vector<128x1xf32>,
    return
  }
  func.func @transform_0(%arg0: i32) -> (i32, i32) {
    %c0_i32 = arith.constant 0 : i32
    %c0_i32_0 = arith.constant 0 : i32
    return %arg0, %c0_i32 : i32, i32
  }
  func.func @transform_1(%arg0: i32) -> (i32, i32) {
    %c0_i32 = arith.constant 0 : i32
    %c0_i32_0 = arith.constant 0 : i32
    %c0_i32_1 = arith.constant 0 : i32
    return %c0_i32, %c0_i32_0 : i32, i32
  }
  func.func @transform_2(%arg0: i32) -> (i32, i32) {
    %c0_i32 = arith.constant 0 : i32
    %c0_i32_0 = arith.constant 0 : i32
    %c0_i32_1 = arith.constant 0 : i32
    return %c0_i32, %c0_i32_0 : i32, i32
  }
  func.func @transform_3(%arg0: i32) -> (i32, i32) {
    %c0_i32 = arith.constant 0 : i32
    %c0_i32_0 = arith.constant 0 : i32
    %c0_i32_1 = arith.constant 0 : i32
    return %c0_i32, %c0_i32_0 : i32, i32
  }
  func.func @transform_4(%arg0: i32) -> (i32, i32) {
    %c0_i32 = arith.constant 0 : i32
    %c0_i32_0 = arith.constant 0 : i32
    %c0_i32_1 = arith.constant 0 : i32
    return %c0_i32, %c0_i32_0 : i32, i32
  }
  func.func @transform_5(%arg0: i32) -> (i32, i32) {
    %c0_i32 = arith.constant 0 : i32
    %c0_i32_0 = arith.constant 0 : i32
    %c0_i32_1 = arith.constant 0 : i32
    return %c0_i32, %c0_i32_0 : i32, i32
  }
  func.func @transform_6(%arg0: i32) -> (i32, i32) {
    %c0_i32 = arith.constant 0 : i32
    %c0_i32_0 = arith.constant 0 : i32
    %c0_i32_1 = arith.constant 0 : i32
    return %c0_i32, %c0_i32_0 : i32, i32
  }
  func.func @transform_7(%arg0: i32) -> (i32, i32) {
    %c0_i32 = arith.constant 0 : i32
    %c0_i32_0 = arith.constant 0 : i32
    %c0_i32_1 = arith.constant 0 : i32
    return %c0_i32, %c0_i32_0 : i32, i32
  }
  func.func @transform_8(%arg0: i32) -> (i32, i32) {
    %c0_i32 = arith.constant 0 : i32
    %c0_i32_0 = arith.constant 0 : i32
    %c0_i32_1 = arith.constant 0 : i32
    return %c0_i32, %c0_i32_0 : i32, i32
  }
  func.func @transform_9(%arg0: i32) -> (i32, i32) {
    %c0_i32 = arith.constant 0 : i32
    %c0_i32_0 = arith.constant 0 : i32
    return %arg0, %c0_i32 : i32, i32
  }
}

</mosaic_0001>

<llo_original>
// kernel: critic_forward.1
$region0: #{critic_forward.1}
  #allocation0 [shape = 'u32[]', space=smem, size = 0x4, offset = 0x4, fixed_abs, tag = 'smem constant byte address 0x4 - core index']
  #allocation1 [shape = 'u32[144,128]{1,0:T(1,128)}', space=vmem, size = 0x12000, scoped, tag = 'internal scratch']
  #allocation2 [shape = 'f32[1,1]{1,0:T(1,128)S(1)}', space=vmem, size = 0x200, scoped, tag = 'scoped memory for critic_forward.1']
  %s0 = inlined_call_operand.vmem [shape: bf16[128,128], index: 0, kind: input, shape index: {}]
  %s1 = inlined_call_operand.vmem [shape: bf16[128,256], index: 1, kind: input, shape index: {}]
  %s2 = inlined_call_operand.vmem [shape: f32[1,256], index: 2, kind: input, shape index: {}]
  %s3 = inlined_call_operand.vmem [shape: bf16[256,256], index: 3, kind: input, shape index: {}]
  %s4 = inlined_call_operand.vmem [shape: f32[1,256], index: 4, kind: input, shape index: {}]
  %s5 = inlined_call_operand.vmem [shape: bf16[256,256], index: 5, kind: input, shape index: {}]
  %s6 = inlined_call_operand.vmem [shape: f32[1,256], index: 6, kind: input, shape index: {}]
  %s7 = inlined_call_operand.vmem [shape: f32[1,256], index: 7, kind: input, shape index: {}]
  %s8 = inlined_call_operand.<no memory space> [shape: f32[1,1], index: 8, kind: input, shape index: {}]
  %s9 = inlined_call_operand.vmem [shape: f32[128,1], index: 9, kind: output, shape index: {}]
  %s10 = sld [smem:[#allocation0]]
  $region46: #{critic_forward.1} parent=0
    _
  %s12 = ssub.s32 1, %s10
  %s13 = scalar_select 0, %s12, %s10
  %v14 = vstv %s8
  %15 = vst [vmem:[#allocation2] sm:$0x1] %v14
  // Predicated region
  $region2: #{critic_forward.1} parent=0 // pred_check
    _
  $region3: #{critic_forward.1} parent=0 // pred_check_branch
    %17 = sbr.rel (0) target = $region5
  $region4: #{critic_forward.1} parent=0 // pred_region
    _
  $region5: #{critic_forward.1} parent=0 // pred_fallthru
    _
  // Predicated region
  $region6: #{critic_forward.1} parent=0 // pred_check
    _
  $region7: #{critic_forward.1} parent=0 // pred_check_branch
    %19 = sbr.rel (0) target = $region9
  $region8: #{critic_forward.1} parent=0 // pred_region
    _
  $region9: #{critic_forward.1} parent=0 // pred_fallthru
    _
  // Predicated region
  $region10: #{critic_forward.1} parent=0 // pred_check
    _
  $region11: #{critic_forward.1} parent=0 // pred_check_branch
    %21 = sbr.rel (0) target = $region13
  $region12: #{critic_forward.1} parent=0 // pred_region
    _
  $region13: #{critic_forward.1} parent=0 // pred_fallthru
    _
  // Predicated region
  $region14: #{critic_forward.1} parent=0 // pred_check
    _
  $region15: #{critic_forward.1} parent=0 // pred_check_branch
    %23 = sbr.rel (0) target = $region17
  $region16: #{critic_forward.1} parent=0 // pred_region
    _
  $region17: #{critic_forward.1} parent=0 // pred_fallthru
    _
  // Predicated region
  $region18: #{critic_forward.1} parent=0 // pred_check
    _
  $region19: #{critic_forward.1} parent=0 // pred_check_branch
    %25 = sbr.rel (0) target = $region21
  $region20: #{critic_forward.1} parent=0 // pred_region
    _
  $region21: #{critic_forward.1} parent=0 // pred_fallthru
    _
  // Predicated region
  $region22: #{critic_forward.1} parent=0 // pred_check
    _
  $region23: #{critic_forward.1} parent=0 // pred_check_branch
    %27 = sbr.rel (0) target = $region25
  $region24: #{critic_forward.1} parent=0 // pred_region
    _
  $region25: #{critic_forward.1} parent=0 // pred_fallthru
    _
  // Predicated region
  $region26: #{critic_forward.1} parent=0 // pred_check
    _
  $region27: #{critic_forward.1} parent=0 // pred_check_branch
    %29 = sbr.rel (0) target = $region29
  $region28: #{critic_forward.1} parent=0 // pred_region
    _
  $region29: #{critic_forward.1} parent=0 // pred_fallthru
    _
  // Predicated region
  $region30: #{critic_forward.1} parent=0 // pred_check
    _
  $region31: #{critic_forward.1} parent=0 // pred_check_branch
    %31 = sbr.rel (0) target = $region33
  $region32: #{critic_forward.1} parent=0 // pred_region
    _
  $region33: #{critic_forward.1} parent=0 // pred_fallthru
    _
  // Predicated region
  $region34: #{critic_forward.1} parent=0 // pred_check
    _
  $region35: #{critic_forward.1} parent=0 // pred_check_branch
    %33 = sbr.rel (0) target = $region37
  $region36: #{critic_forward.1} parent=0 // pred_region
    _
  $region37: #{critic_forward.1} parent=0 // pred_fallthru
    _
  %v35 = vld [vmem:[%s0] sm:$0xf]
  %v36 = vld [vmem:[%s0 + $0x4] sm:$0xf]
  %v37 = vld [vmem:[%s0 + $0x8] sm:$0xf]
  %v38 = vld [vmem:[%s0 + $0xc] sm:$0xf]
  %v39 = vld [vmem:[%s0 + $0x10] sm:$0xf]
  %v40 = vld [vmem:[%s0 + $0x14] sm:$0xf]
  %v41 = vld [vmem:[%s0 + $0x18] sm:$0xf]
  %v42 = vld [vmem:[%s0 + $0x1c] sm:$0xf]
  %v43 = vld [vmem:[%s0 + $0x20] sm:$0xf]
  %v44 = vld [vmem:[%s0 + $0x24] sm:$0xf]
  %v45 = vld [vmem:[%s0 + $0x28] sm:$0xf]
  %v46 = vld [vmem:[%s0 + $0x2c] sm:$0xf]
  %v47 = vld [vmem:[%s0 + $0x30] sm:$0xf]
  %v48 = vld [vmem:[%s0 + $0x34] sm:$0xf]
  %v49 = vld [vmem:[%s0 + $0x38] sm:$0xf]
  %v50 = vld [vmem:[%s0 + $0x3c] sm:$0xf]
  %v51 = vld [vmem:[%s1] sm:$0xff]
  %v52 = vld [vmem:[%s1 + $0x8] sm:$0xff]
  %v53 = vld [vmem:[%s1 + $0x10] sm:$0xff]
  %v54 = vld [vmem:[%s1 + $0x18] sm:$0xff]
  %v55 = vld [vmem:[%s1 + $0x20] sm:$0xff]
  %v56 = vld [vmem:[%s1 + $0x28] sm:$0xff]
  %v57 = vld [vmem:[%s1 + $0x30] sm:$0xff]
  %v58 = vld [vmem:[%s1 + $0x38] sm:$0xff]
  %v59 = vld [vmem:[%s1 + $0x40] sm:$0xff]
  %v60 = vld [vmem:[%s1 + $0x48] sm:$0xff]
  %v61 = vld [vmem:[%s1 + $0x50] sm:$0xff]
  %v62 = vld [vmem:[%s1 + $0x58] sm:$0xff]
  %v63 = vld [vmem:[%s1 + $0x60] sm:$0xff]
  %v64 = vld [vmem:[%s1 + $0x68] sm:$0xff]
  %v65 = vld [vmem:[%s1 + $0x70] sm:$0xff]
  %v66 = vld [vmem:[%s1 + $0x78] sm:$0xff]
  %v67 = vld [vmem:[%s2] sm:$0x3]
  %v69 = vlaneseq
  %v70 = vshrl.u32 %v69, 7
  %v71 = vsub.s32 0, %v70
  %v72 = vrot.slane %v67, %v71
  %v73 = vlaneseq
  %v74 = vshrl.u32 %v73, 7
  %v75 = vsub.s32 1, %v74
  %v76 = vrot.slane %v67, %v75
  %v95 = vunpack.c.l.b16 %v35
  %v96 = vunpack.c.l.b16 %v36
  %v97 = vunpack.c.l.b16 %v37
  %v98 = vunpack.c.l.b16 %v38
  %v99 = vunpack.c.l.b16 %v39
  %v100 = vunpack.c.l.b16 %v40
  %v101 = vunpack.c.l.b16 %v41
  %v102 = vunpack.c.l.b16 %v42
  %v103 = vunpack.c.l.b16 %v43
  %v104 = vunpack.c.l.b16 %v44
  %v105 = vunpack.c.l.b16 %v45
  %v106 = vunpack.c.l.b16 %v46
  %v107 = vunpack.c.l.b16 %v47
  %v108 = vunpack.c.l.b16 %v48
  %v109 = vunpack.c.l.b16 %v49
  %v110 = vunpack.c.l.b16 %v50
  %v111 = vpack.c.b16 %v96, %v95
  %v112 = vpack.c.b16 %v98, %v97
  %v113 = vpack.c.b16 %v100, %v99
  %v114 = vpack.c.b16 %v102, %v101
  %v115 = vpack.c.b16 %v104, %v103
  %v116 = vpack.c.b16 %v106, %v105
  %v117 = vpack.c.b16 %v108, %v107
  %v118 = vpack.c.b16 %v110, %v109
  %v143 = vunpack.c.l.b16 %v51
  %v144 = vunpack.c.h.b16 %v51
  %v145 = vunpack.c.l.b16 %v52
  %v146 = vunpack.c.h.b16 %v52
  %v147 = vunpack.c.l.b16 %v53
  %v148 = vunpack.c.h.b16 %v53
  %v149 = vunpack.c.l.b16 %v54
  %v150 = vunpack.c.h.b16 %v54
  %v151 = vunpack.c.l.b16 %v55
  %v152 = vunpack.c.h.b16 %v55
  %v153 = vunpack.c.l.b16 %v56
  %v154 = vunpack.c.h.b16 %v56
  %v155 = vunpack.c.l.b16 %v57
  %v156 = vunpack.c.h.b16 %v57
  %v157 = vunpack.c.l.b16 %v58
  %v158 = vunpack.c.h.b16 %v58
  %v159 = vunpack.c.l.b16 %v59
  %v160 = vunpack.c.h.b16 %v59
  %v161 = vunpack.c.l.b16 %v60
  %v162 = vunpack.c.h.b16 %v60
  %v163 = vunpack.c.l.b16 %v61
  %v164 = vunpack.c.h.b16 %v61
  %v165 = vunpack.c.l.b16 %v62
  %v166 = vunpack.c.h.b16 %v62
  %v167 = vunpack.c.l.b16 %v63
  %v168 = vunpack.c.h.b16 %v63
  %v169 = vunpack.c.l.b16 %v64
  %v170 = vunpack.c.h.b16 %v64
  %v171 = vunpack.c.l.b16 %v65
  %v172 = vunpack.c.h.b16 %v65
  %v173 = vunpack.c.l.b16 %v66
  %v174 = vunpack.c.h.b16 %v66
  %v175 = vpack.c.b16 %v145, %v143
  %v176 = vpack.c.b16 %v146, %v144
  %v177 = vpack.c.b16 %v149, %v147
  %v178 = vpack.c.b16 %v150, %v148
  %v179 = vpack.c.b16 %v153, %v151
  %v180 = vpack.c.b16 %v154, %v152
  %v181 = vpack.c.b16 %v157, %v155
  %v182 = vpack.c.b16 %v158, %v156
  %v183 = vpack.c.b16 %v161, %v159
  %v184 = vpack.c.b16 %v162, %v160
  %v185 = vpack.c.b16 %v165, %v163
  %v186 = vpack.c.b16 %v166, %v164
  %v187 = vpack.c.b16 %v169, %v167
  %v188 = vpack.c.b16 %v170, %v168
  %v189 = vpack.c.b16 %v173, %v171
  %v190 = vpack.c.b16 %v174, %v172
  %207 = vmatprep.subr.bf16.mxu0 %v176
  %208 = vmatpush1.bf16.msra.mxu0 %v175
  %209 = vmatprep.subr.bf16.mxu0 %v178
  %210 = vmatpush1.bf16.msra.mxu0 %v177
  %211 = vmatprep.subr.bf16.mxu0 %v180
  %212 = vmatpush1.bf16.msra.mxu0 %v179
  %213 = vmatprep.subr.bf16.mxu0 %v182
  %214 = vmatpush1.bf16.msra.mxu0 %v181
  %215 = vmatprep.subr.bf16.mxu0 %v184
  %216 = vmatpush1.bf16.msra.mxu0 %v183
  %217 = vmatprep.subr.bf16.mxu0 %v186
  %218 = vmatpush1.bf16.msra.mxu0 %v185
  %219 = vmatprep.subr.bf16.mxu0 %v188
  %220 = vmatpush1.bf16.msra.mxu0 %v187
  %221 = vmatprep.subr.bf16.mxu0 %v190
  %222 = vmatpush1.bf16.msra.mxu0 %v189
  %223 = vmatprep.subr.bf16.mxu0 0
  %224 = vmatpush1.bf16.msra.mxu0 0
  %225 = vmatprep.subr.bf16.mxu0 0
  %226 = vmatpush1.bf16.msra.mxu0 0
  %227 = vmatprep.subr.bf16.mxu0 0
  %228 = vmatpush1.bf16.msra.mxu0 0
  %229 = vmatprep.subr.bf16.mxu0 0
  %230 = vmatpush1.bf16.msra.mxu0 0
  %231 = vmatprep.subr.bf16.mxu0 0
  %232 = vmatpush1.bf16.msra.mxu0 0
  %233 = vmatprep.subr.bf16.mxu0 0
  %234 = vmatpush1.bf16.msra.mxu0 0
  %235 = vmatprep.subr.bf16.mxu0 0
  %236 = vmatpush1.bf16.msra.mxu0 0
  %237 = vmatprep.subr.bf16.mxu0 0
  %238 = vmatpush1.bf16.msra.mxu0 0
  %239 = vmatprep.mubr.bf16.mxu0 0
  %240 = vmatmul.mubr.bf16.gmra.mrb[0].mxu0 %v111
  %v241 = vpop.f32.mrb[0].mxu0
  %v242 = vadd.f32 %v72, %v241
  %v243 = vpop.f32.mrb[0].mxu0
  %v244 = vadd.f32 %v76, %v243
  %v245 = vpop.f32.mrb[0].mxu0
  %v246 = vadd.f32 %v72, %v245
  %v247 = vpop.f32.mrb[0].mxu0
  %v248 = vadd.f32 %v76, %v247
  %249 = vmatprep.mubr.bf16.mxu0 0
  %250 = vmatmul.mubr.bf16.gmra.mrb[0].mxu0 %v112
  %v251 = vpop.f32.mrb[0].mxu0
  %v252 = vadd.f32 %v72, %v251
  %v253 = vpop.f32.mrb[0].mxu0
  %v254 = vadd.f32 %v76, %v253
  %v255 = vpop.f32.mrb[0].mxu0
  %v256 = vadd.f32 %v72, %v255
  %v257 = vpop.f32.mrb[0].mxu0
  %v258 = vadd.f32 %v76, %v257
  %259 = vmatprep.mubr.bf16.mxu0 0
  %260 = vmatmul.mubr.bf16.gmra.mrb[0].mxu0 %v113
  %v261 = vpop.f32.mrb[0].mxu0
  %v262 = vadd.f32 %v72, %v261
  %v263 = vpop.f32.mrb[0].mxu0
  %v264 = vadd.f32 %v76, %v263
  %v265 = vpop.f32.mrb[0].mxu0
  %v266 = vadd.f32 %v72, %v265
  %v267 = vpop.f32.mrb[0].mxu0
  %v268 = vadd.f32 %v76, %v267
  %269 = vmatprep.mubr.bf16.mxu0 0
  %270 = vmatmul.mubr.bf16.gmra.mrb[0].mxu0 %v114
  %v271 = vpop.f32.mrb[0].mxu0
  %v272 = vadd.f32 %v72, %v271
  %v273 = vpop.f32.mrb[0].mxu0
  %v274 = vadd.f32 %v76, %v273
  %v275 = vpop.f32.mrb[0].mxu0
  %v276 = vadd.f32 %v72, %v275
  %v277 = vpop.f32.mrb[0].mxu0
  %v278 = vadd.f32 %v76, %v277
  %279 = vmatprep.mubr.bf16.mxu0 0
  %280 = vmatmul.mubr.bf16.gmra.mrb[0].mxu0 %v115
  %v281 = vpop.f32.mrb[0].mxu0
  %v282 = vadd.f32 %v72, %v281
  %v283 = vpop.f32.mrb[0].mxu0
  %v284 = vadd.f32 %v76, %v283
  %v285 = vpop.f32.mrb[0].mxu0
  %v286 = vadd.f32 %v72, %v285
  %v287 = vpop.f32.mrb[0].mxu0
  %v288 = vadd.f32 %v76, %v287
  %289 = vmatprep.mubr.bf16.mxu0 0
  %290 = vmatmul.mubr.bf16.gmra.mrb[0].mxu0 %v116
  %v291 = vpop.f32.mrb[0].mxu0
  %v292 = vadd.f32 %v72, %v291
  %v293 = vpop.f32.mrb[0].mxu0
  %v294 = vadd.f32 %v76, %v293
  %v295 = vpop.f32.mrb[0].mxu0
  %v296 = vadd.f32 %v72, %v295
  %v297 = vpop.f32.mrb[0].mxu0
  %v298 = vadd.f32 %v76, %v297
  %299 = vmatprep.mubr.bf16.mxu0 0
  %300 = vmatmul.mubr.bf16.gmra.mrb[0].mxu0 %v117
  %v301 = vpop.f32.mrb[0].mxu0
  %v302 = vadd.f32 %v72, %v301
  %v303 = vpop.f32.mrb[0].mxu0
  %v304 = vadd.f32 %v76, %v303
  %v305 = vpop.f32.mrb[0].mxu0
  %v306 = vadd.f32 %v72, %v305
  %v307 = vpop.f32.mrb[0].mxu0
  %v308 = vadd.f32 %v76, %v307
  %309 = vmatprep.mubr.bf16.mxu0 0
  %310 = vmatmul.mubr.bf16.gmra.mrb[0].mxu0 %v118
  %v311 = vpop.f32.mrb[0].mxu0
  %v312 = vadd.f32 %v72, %v311
  %v313 = vpop.f32.mrb[0].mxu0
  %v314 = vadd.f32 %v76, %v313
  %v315 = vpop.f32.mrb[0].mxu0
  %v316 = vadd.f32 %v72, %v315
  %v317 = vpop.f32.mrb[0].mxu0
  %v318 = vadd.f32 %v76, %v317
  %319 = vdwg.mxu0
  %v320 = vmax.f32 %v242, 0.0
  %v321 = vmax.f32 %v244, 0.0
  %v322 = vmax.f32 %v246, 0.0
  %v323 = vmax.f32 %v248, 0.0
  %v324 = vmax.f32 %v252, 0.0
  %v325 = vmax.f32 %v254, 0.0
  %v326 = vmax.f32 %v256, 0.0
  %v327 = vmax.f32 %v258, 0.0
  %v328 = vmax.f32 %v262, 0.0
  %v329 = vmax.f32 %v264, 0.0
  %v330 = vmax.f32 %v266, 0.0
  %v331 = vmax.f32 %v268, 0.0
  %v332 = vmax.f32 %v272, 0.0
  %v333 = vmax.f32 %v274, 0.0
  %v334 = vmax.f32 %v276, 0.0
  %v335 = vmax.f32 %v278, 0.0
  %v336 = vmax.f32 %v282, 0.0
  %v337 = vmax.f32 %v284, 0.0
  %v338 = vmax.f32 %v286, 0.0
  %v339 = vmax.f32 %v288, 0.0
  %v340 = vmax.f32 %v292, 0.0
  %v341 = vmax.f32 %v294, 0.0
  %v342 = vmax.f32 %v296, 0.0
  %v343 = vmax.f32 %v298, 0.0
  %v344 = vmax.f32 %v302, 0.0
  %v345 = vmax.f32 %v304, 0.0
  %v346 = vmax.f32 %v306, 0.0
  %v347 = vmax.f32 %v308, 0.0
  %v348 = vmax.f32 %v312, 0.0
  %v349 = vmax.f32 %v314, 0.0
  %v350 = vmax.f32 %v316, 0.0
  %v351 = vmax.f32 %v318, 0.0
  %v352 = vpack.c.bf16 %v322, %v320
  %v353 = vpack.c.bf16 %v323, %v321
  %v354 = vpack.c.bf16 %v326, %v324
  %v355 = vpack.c.bf16 %v327, %v325
  %v356 = vpack.c.bf16 %v330, %v328
  %v357 = vpack.c.bf16 %v331, %v329
  %v358 = vpack.c.bf16 %v334, %v332
  %v359 = vpack.c.bf16 %v335, %v333
  %v360 = vpack.c.bf16 %v338, %v336
  %v361 = vpack.c.bf16 %v339, %v337
  %v362 = vpack.c.bf16 %v342, %v340
  %v363 = vpack.c.bf16 %v343, %v341
  %v364 = vpack.c.bf16 %v346, %v344
  %v365 = vpack.c.bf16 %v347, %v345
  %v366 = vpack.c.bf16 %v350, %v348
  %v367 = vpack.c.bf16 %v351, %v349
  %v368 = vld [vmem:[%s3] sm:$0xff]
  %v369 = vld [vmem:[%s3 + $0x8] sm:$0xff]
  %v370 = vld [vmem:[%s3 + $0x10] sm:$0xff]
  %v371 = vld [vmem:[%s3 + $0x18] sm:$0xff]
  %v372 = vld [vmem:[%s3 + $0x20] sm:$0xff]
  %v373 = vld [vmem:[%s3 + $0x28] sm:$0xff]
  %v374 = vld [vmem:[%s3 + $0x30] sm:$0xff]
  %v375 = vld [vmem:[%s3 + $0x38] sm:$0xff]
  %v376 = vld [vmem:[%s3 + $0x40] sm:$0xff]
  %v377 = vld [vmem:[%s3 + $0x48] sm:$0xff]
  %v378 = vld [vmem:[%s3 + $0x50] sm:$0xff]
  %v379 = vld [vmem:[%s3 + $0x58] sm:$0xff]
  %v380 = vld [vmem:[%s3 + $0x60] sm:$0xff]
  %v381 = vld [vmem:[%s3 + $0x68] sm:$0xff]
  %v382 = vld [vmem:[%s3 + $0x70] sm:$0xff]
  %v383 = vld [vmem:[%s3 + $0x78] sm:$0xff]
  %v384 = vld [vmem:[%s3 + $0x80] sm:$0xff]
  %v385 = vld [vmem:[%s3 + $0x88] sm:$0xff]
  %v386 = vld [vmem:[%s3 + $0x90] sm:$0xff]
  %v387 = vld [vmem:[%s3 + $0x98] sm:$0xff]
  %v388 = vld [vmem:[%s3 + $0xa0] sm:$0xff]
  %v389 = vld [vmem:[%s3 + $0xa8] sm:$0xff]
  %v390 = vld [vmem:[%s3 + $0xb0] sm:$0xff]
  %v391 = vld [vmem:[%s3 + $0xb8] sm:$0xff]
  %v392 = vld [vmem:[%s3 + $0xc0] sm:$0xff]
  %v393 = vld [vmem:[%s3 + $0xc8] sm:$0xff]
  %v394 = vld [vmem:[%s3 + $0xd0] sm:$0xff]
  %v395 = vld [vmem:[%s3 + $0xd8] sm:$0xff]
  %v396 = vld [vmem:[%s3 + $0xe0] sm:$0xff]
  %v397 = vld [vmem:[%s3 + $0xe8] sm:$0xff]
  %v398 = vld [vmem:[%s3 + $0xf0] sm:$0xff]
  %v399 = vld [vmem:[%s3 + $0xf8] sm:$0xff]
  %v400 = vld [vmem:[%s4] sm:$0x3]
  %v402 = vlaneseq
  %v403 = vshrl.u32 %v402, 7
  %v404 = vsub.s32 0, %v403
  %v405 = vrot.slane %v400, %v404
  %v406 = vlaneseq
  %v407 = vshrl.u32 %v406, 7
  %v408 = vsub.s32 1, %v407
  %v409 = vrot.slane %v400, %v408
  %v444 = vunpack.c.l.b16 %v368
  %v445 = vunpack.c.h.b16 %v368
  %v446 = vunpack.c.l.b16 %v369
  %v447 = vunpack.c.h.b16 %v369
  %v448 = vunpack.c.l.b16 %v370
  %v449 = vunpack.c.h.b16 %v370
  %v450 = vunpack.c.l.b16 %v371
  %v451 = vunpack.c.h.b16 %v371
  %v452 = vunpack.c.l.b16 %v372
  %v453 = vunpack.c.h.b16 %v372
  %v454 = vunpack.c.l.b16 %v373
  %v455 = vunpack.c.h.b16 %v373
  %v456 = vunpack.c.l.b16 %v374
  %v457 = vunpack.c.h.b16 %v374
  %v458 = vunpack.c.l.b16 %v375
  %v459 = vunpack.c.h.b16 %v375
  %v460 = vunpack.c.l.b16 %v376
  %v461 = vunpack.c.h.b16 %v376
  %v462 = vunpack.c.l.b16 %v377
  %v463 = vunpack.c.h.b16 %v377
  %v464 = vunpack.c.l.b16 %v378
  %v465 = vunpack.c.h.b16 %v378
  %v466 = vunpack.c.l.b16 %v379
  %v467 = vunpack.c.h.b16 %v379
  %v468 = vunpack.c.l.b16 %v380
  %v469 = vunpack.c.h.b16 %v380
  %v470 = vunpack.c.l.b16 %v381
  %v471 = vunpack.c.h.b16 %v381
  %v472 = vunpack.c.l.b16 %v382
  %v473 = vunpack.c.h.b16 %v382
  %v474 = vunpack.c.l.b16 %v383
  %v475 = vunpack.c.h.b16 %v383
  %v476 = vunpack.c.l.b16 %v384
  %v477 = vunpack.c.h.b16 %v384
  %v478 = vunpack.c.l.b16 %v385
  %v479 = vunpack.c.h.b16 %v385
  %v480 = vunpack.c.l.b16 %v386
  %v481 = vunpack.c.h.b16 %v386
  %v482 = vunpack.c.l.b16 %v387
  %v483 = vunpack.c.h.b16 %v387
  %v484 = vunpack.c.l.b16 %v388
  %v485 = vunpack.c.h.b16 %v388
  %v486 = vunpack.c.l.b16 %v389
  %v487 = vunpack.c.h.b16 %v389
  %v488 = vunpack.c.l.b16 %v390
  %v489 = vunpack.c.h.b16 %v390
  %v490 = vunpack.c.l.b16 %v391
  %v491 = vunpack.c.h.b16 %v391
  %v492 = vunpack.c.l.b16 %v392
  %v493 = vunpack.c.h.b16 %v392
  %v494 = vunpack.c.l.b16 %v393
  %v495 = vunpack.c.h.b16 %v393
  %v496 = vunpack.c.l.b16 %v394
  %v497 = vunpack.c.h.b16 %v394
  %v498 = vunpack.c.l.b16 %v395
  %v499 = vunpack.c.h.b16 %v395
  %v500 = vunpack.c.l.b16 %v396
  %v501 = vunpack.c.h.b16 %v396
  %v502 = vunpack.c.l.b16 %v397
  %v503 = vunpack.c.h.b16 %v397
  %v504 = vunpack.c.l.b16 %v398
  %v505 = vunpack.c.h.b16 %v398
  %v506 = vunpack.c.l.b16 %v399
  %v507 = vunpack.c.h.b16 %v399
  %v508 = vpack.c.b16 %v446, %v444
  %v509 = vpack.c.b16 %v447, %v445
  %v510 = vpack.c.b16 %v450, %v448
  %v511 = vpack.c.b16 %v451, %v449
  %v512 = vpack.c.b16 %v454, %v452
  %v513 = vpack.c.b16 %v455, %v453
  %v514 = vpack.c.b16 %v458, %v456
  %v515 = vpack.c.b16 %v459, %v457
  %v516 = vpack.c.b16 %v462, %v460
  %v517 = vpack.c.b16 %v463, %v461
  %v518 = vpack.c.b16 %v466, %v464
  %v519 = vpack.c.b16 %v467, %v465
  %v520 = vpack.c.b16 %v470, %v468
  %v521 = vpack.c.b16 %v471, %v469
  %v522 = vpack.c.b16 %v474, %v472
  %v523 = vpack.c.b16 %v475, %v473
  %v524 = vpack.c.b16 %v478, %v476
  %v525 = vpack.c.b16 %v479, %v477
  %v526 = vpack.c.b16 %v482, %v480
  %v527 = vpack.c.b16 %v483, %v481
  %v528 = vpack.c.b16 %v486, %v484
  %v529 = vpack.c.b16 %v487, %v485
  %v530 = vpack.c.b16 %v490, %v488
  %v531 = vpack.c.b16 %v491, %v489
  %v532 = vpack.c.b16 %v494, %v492
  %v533 = vpack.c.b16 %v495, %v493
  %v534 = vpack.c.b16 %v498, %v496
  %v535 = vpack.c.b16 %v499, %v497
  %v536 = vpack.c.b16 %v502, %v500
  %v537 = vpack.c.b16 %v503, %v501
  %v538 = vpack.c.b16 %v506, %v504
  %v539 = vpack.c.b16 %v507, %v505
  %572 = vmatprep.subr.bf16.mxu0 %v509
  %573 = vmatpush1.bf16.msra.mxu0 %v508
  %574 = vmatprep.subr.bf16.mxu0 %v511
  %575 = vmatpush1.bf16.msra.mxu0 %v510
  %576 = vmatprep.subr.bf16.mxu0 %v513
  %577 = vmatpush1.bf16.msra.mxu0 %v512
  %578 = vmatprep.subr.bf16.mxu0 %v515
  %579 = vmatpush1.bf16.msra.mxu0 %v514
  %580 = vmatprep.subr.bf16.mxu0 %v517
  %581 = vmatpush1.bf16.msra.mxu0 %v516
  %582 = vmatprep.subr.bf16.mxu0 %v519
  %583 = vmatpush1.bf16.msra.mxu0 %v518
  %584 = vmatprep.subr.bf16.mxu0 %v521
  %585 = vmatpush1.bf16.msra.mxu0 %v520
  %586 = vmatprep.subr.bf16.mxu0 %v523
  %587 = vmatpush1.bf16.msra.mxu0 %v522
  %588 = vmatprep.subr.bf16.mxu0 %v525
  %589 = vmatpush1.bf16.msra.mxu0 %v524
  %590 = vmatprep.subr.bf16.mxu0 %v527
  %591 = vmatpush1.bf16.msra.mxu0 %v526
  %592 = vmatprep.subr.bf16.mxu0 %v529
  %593 = vmatpush1.bf16.msra.mxu0 %v528
  %594 = vmatprep.subr.bf16.mxu0 %v531
  %595 = vmatpush1.bf16.msra.mxu0 %v530
  %596 = vmatprep.subr.bf16.mxu0 %v533
  %597 = vmatpush1.bf16.msra.mxu0 %v532
  %598 = vmatprep.subr.bf16.mxu0 %v535
  %599 = vmatpush1.bf16.msra.mxu0 %v534
  %600 = vmatprep.subr.bf16.mxu0 %v537
  %601 = vmatpush1.bf16.msra.mxu0 %v536
  %602 = vmatprep.subr.bf16.mxu0 %v539
  %603 = vmatpush1.bf16.msra.mxu0 %v538
  %604 = vmatprep.mubr.bf16.mxu0 %v353
  %605 = vmatmul.mubr.bf16.gmra.mrb[0].mxu0 %v352
  %v606 = vpop.f32.mrb[0].mxu0
  %v607 = vadd.f32 %v405, %v606
  %v608 = vpop.f32.mrb[0].mxu0
  %v609 = vadd.f32 %v409, %v608
  %v610 = vpop.f32.mrb[0].mxu0
  %v611 = vadd.f32 %v405, %v610
  %v612 = vpop.f32.mrb[0].mxu0
  %v613 = vadd.f32 %v409, %v612
  %614 = vmatprep.mubr.bf16.mxu0 %v355
  %615 = vmatmul.mubr.bf16.gmra.mrb[0].mxu0 %v354
  %v616 = vpop.f32.mrb[0].mxu0
  %v617 = vadd.f32 %v405, %v616
  %v618 = vpop.f32.mrb[0].mxu0
  %v619 = vadd.f32 %v409, %v618
  %v620 = vpop.f32.mrb[0].mxu0
  %v621 = vadd.f32 %v405, %v620
  %v622 = vpop.f32.mrb[0].mxu0
  %v623 = vadd.f32 %v409, %v622
  %624 = vmatprep.mubr.bf16.mxu0 %v357
  %625 = vmatmul.mubr.bf16.gmra.mrb[0].mxu0 %v356
  %v626 = vpop.f32.mrb[0].mxu0
  %v627 = vadd.f32 %v405, %v626
  %v628 = vpop.f32.mrb[0].mxu0
  %v629 = vadd.f32 %v409, %v628
  %v630 = vpop.f32.mrb[0].mxu0
  %v631 = vadd.f32 %v405, %v630
  %v632 = vpop.f32.mrb[0].mxu0
  %v633 = vadd.f32 %v409, %v632
  %634 = vmatprep.mubr.bf16.mxu0 %v359
  %635 = vmatmul.mubr.bf16.gmra.mrb[0].mxu0 %v358
  %v636 = vpop.f32.mrb[0].mxu0
  %v637 = vadd.f32 %v405, %v636
  %v638 = vpop.f32.mrb[0].mxu0
  %v639 = vadd.f32 %v409, %v638
  %v640 = vpop.f32.mrb[0].mxu0
  %v641 = vadd.f32 %v405, %v640
  %v642 = vpop.f32.mrb[0].mxu0
  %v643 = vadd.f32 %v409, %v642
  %644 = vmatprep.mubr.bf16.mxu0 %v361
  %645 = vmatmul.mubr.bf16.gmra.mrb[0].mxu0 %v360
  %v646 = vpop.f32.mrb[0].mxu0
  %v647 = vadd.f32 %v405, %v646
  %v648 = vpop.f32.mrb[0].mxu0
  %v649 = vadd.f32 %v409, %v648
  %v650 = vpop.f32.mrb[0].mxu0
  %v651 = vadd.f32 %v405, %v650
  %v652 = vpop.f32.mrb[0].mxu0
  %v653 = vadd.f32 %v409, %v652
  %654 = vmatprep.mubr.bf16.mxu0 %v363
  %655 = vmatmul.mubr.bf16.gmra.mrb[0].mxu0 %v362
  %v656 = vpop.f32.mrb[0].mxu0
  %v657 = vadd.f32 %v405, %v656
  %v658 = vpop.f32.mrb[0].mxu0
  %v659 = vadd.f32 %v409, %v658
  %v660 = vpop.f32.mrb[0].mxu0
  %v661 = vadd.f32 %v405, %v660
  %v662 = vpop.f32.mrb[0].mxu0
  %v663 = vadd.f32 %v409, %v662
  %664 = vmatprep.mubr.bf16.mxu0 %v365
  %665 = vmatmul.mubr.bf16.gmra.mrb[0].mxu0 %v364
  %v666 = vpop.f32.mrb[0].mxu0
  %v667 = vadd.f32 %v405, %v666
  %v668 = vpop.f32.mrb[0].mxu0
  %v669 = vadd.f32 %v409, %v668
  %v670 = vpop.f32.mrb[0].mxu0
  %v671 = vadd.f32 %v405, %v670
  %v672 = vpop.f32.mrb[0].mxu0
  %v673 = vadd.f32 %v409, %v672
  %674 = vmatprep.mubr.bf16.mxu0 %v367
  %675 = vmatmul.mubr.bf16.gmra.mrb[0].mxu0 %v366
  %v676 = vpop.f32.mrb[0].mxu0
  %v677 = vadd.f32 %v405, %v676
  %v678 = vpop.f32.mrb[0].mxu0
  %v679 = vadd.f32 %v409, %v678
  %v680 = vpop.f32.mrb[0].mxu0
  %v681 = vadd.f32 %v405, %v680
  %v682 = vpop.f32.mrb[0].mxu0
  %v683 = vadd.f32 %v409, %v682
  %684 = vdwg.mxu0
  %v685 = vmax.f32 %v607, 0.0
  %v686 = vmax.f32 %v609, 0.0
  %v687 = vmax.f32 %v611, 0.0
  %v688 = vmax.f32 %v613, 0.0
  %v689 = vmax.f32 %v617, 0.0
  %v690 = vmax.f32 %v619, 0.0
  %v691 = vmax.f32 %v621, 0.0
  %v692 = vmax.f32 %v623, 0.0
  %v693 = vmax.f32 %v627, 0.0
  %v694 = vmax.f32 %v629, 0.0
  %v695 = vmax.f32 %v631, 0.0
  %v696 = vmax.f32 %v633, 0.0
  %v697 = vmax.f32 %v637, 0.0
  %v698 = vmax.f32 %v639, 0.0
  %v699 = vmax.f32 %v641, 0.0
  %v700 = vmax.f32 %v643, 0.0
  %v701 = vmax.f32 %v647, 0.0
  %v702 = vmax.f32 %v649, 0.0
  %v703 = vmax.f32 %v651, 0.0
  %v704 = vmax.f32 %v653, 0.0
  %v705 = vmax.f32 %v657, 0.0
  %v706 = vmax.f32 %v659, 0.0
  %v707 = vmax.f32 %v661, 0.0
  %v708 = vmax.f32 %v663, 0.0
  %v709 = vmax.f32 %v667, 0.0
  %v710 = vmax.f32 %v669, 0.0
  %v711 = vmax.f32 %v671, 0.0
  %v712 = vmax.f32 %v673, 0.0
  %v713 = vmax.f32 %v677, 0.0
  %v714 = vmax.f32 %v679, 0.0
  %v715 = vmax.f32 %v681, 0.0
  %v716 = vmax.f32 %v683, 0.0
  %v717 = vpack.c.bf16 %v687, %v685
  %v718 = vpack.c.bf16 %v688, %v686
  %v719 = vpack.c.bf16 %v691, %v689
  %v720 = vpack.c.bf16 %v692, %v690
  %v721 = vpack.c.bf16 %v695, %v693
  %v722 = vpack.c.bf16 %v696, %v694
  %v723 = vpack.c.bf16 %v699, %v697
  %v724 = vpack.c.bf16 %v700, %v698
  %v725 = vpack.c.bf16 %v703, %v701
  %v726 = vpack.c.bf16 %v704, %v702
  %v727 = vpack.c.bf16 %v707, %v705
  %v728 = vpack.c.bf16 %v708, %v706
  %v729 = vpack.c.bf16 %v711, %v709
  %v730 = vpack.c.bf16 %v712, %v710
  %v731 = vpack.c.bf16 %v715, %v713
  %v732 = vpack.c.bf16 %v716, %v714
  %v733 = vld [vmem:[%s5] sm:$0xff]
  %v734 = vld [vmem:[%s5 + $0x8] sm:$0xff]
  %v735 = vld [vmem:[%s5 + $0x10] sm:$0xff]
  %v736 = vld [vmem:[%s5 + $0x18] sm:$0xff]
  %v737 = vld [vmem:[%s5 + $0x20] sm:$0xff]
  %v738 = vld [vmem:[%s5 + $0x28] sm:$0xff]
  %v739 = vld [vmem:[%s5 + $0x30] sm:$0xff]
  %v740 = vld [vmem:[%s5 + $0x38] sm:$0xff]
  %v741 = vld [vmem:[%s5 + $0x40] sm:$0xff]
  %v742 = vld [vmem:[%s5 + $0x48] sm:$0xff]
  %v743 = vld [vmem:[%s5 + $0x50] sm:$0xff]
  %v744 = vld [vmem:[%s5 + $0x58] sm:$0xff]
  %v745 = vld [vmem:[%s5 + $0x60] sm:$0xff]
  %v746 = vld [vmem:[%s5 + $0x68] sm:$0xff]
  %v747 = vld [vmem:[%s5 + $0x70] sm:$0xff]
  %v748 = vld [vmem:[%s5 + $0x78] sm:$0xff]
  %v749 = vld [vmem:[%s5 + $0x80] sm:$0xff]
  %v750 = vld [vmem:[%s5 + $0x88] sm:$0xff]
  %v751 = vld [vmem:[%s5 + $0x90] sm:$0xff]
  %v752 = vld [vmem:[%s5 + $0x98] sm:$0xff]
  %v753 = vld [vmem:[%s5 + $0xa0] sm:$0xff]
  %v754 = vld [vmem:[%s5 + $0xa8] sm:$0xff]
  %v755 = vld [vmem:[%s5 + $0xb0] sm:$0xff]
  %v756 = vld [vmem:[%s5 + $0xb8] sm:$0xff]
  %v757 = vld [vmem:[%s5 + $0xc0] sm:$0xff]
  %v758 = vld [vmem:[%s5 + $0xc8] sm:$0xff]
  %v759 = vld [vmem:[%s5 + $0xd0] sm:$0xff]
  %v760 = vld [vmem:[%s5 + $0xd8] sm:$0xff]
  %v761 = vld [vmem:[%s5 + $0xe0] sm:$0xff]
  %v762 = vld [vmem:[%s5 + $0xe8] sm:$0xff]
  %v763 = vld [vmem:[%s5 + $0xf0] sm:$0xff]
  %v764 = vld [vmem:[%s5 + $0xf8] sm:$0xff]
  %v765 = vld [vmem:[%s6] sm:$0x3]
  %v767 = vlaneseq
  %v768 = vshrl.u32 %v767, 7
  %v769 = vsub.s32 0, %v768
  %v770 = vrot.slane %v765, %v769
  %v771 = vlaneseq
  %v772 = vshrl.u32 %v771, 7
  %v773 = vsub.s32 1, %v772
  %v774 = vrot.slane %v765, %v773
  %v809 = vunpack.c.l.b16 %v733
  %v810 = vunpack.c.h.b16 %v733
  %v811 = vunpack.c.l.b16 %v734
  %v812 = vunpack.c.h.b16 %v734
  %v813 = vunpack.c.l.b16 %v735
  %v814 = vunpack.c.h.b16 %v735
  %v815 = vunpack.c.l.b16 %v736
  %v816 = vunpack.c.h.b16 %v736
  %v817 = vunpack.c.l.b16 %v737
  %v818 = vunpack.c.h.b16 %v737
  %v819 = vunpack.c.l.b16 %v738
  %v820 = vunpack.c.h.b16 %v738
  %v821 = vunpack.c.l.b16 %v739
  %v822 = vunpack.c.h.b16 %v739
  %v823 = vunpack.c.l.b16 %v740
  %v824 = vunpack.c.h.b16 %v740
  %v825 = vunpack.c.l.b16 %v741
  %v826 = vunpack.c.h.b16 %v741
  %v827 = vunpack.c.l.b16 %v742
  %v828 = vunpack.c.h.b16 %v742
  %v829 = vunpack.c.l.b16 %v743
  %v830 = vunpack.c.h.b16 %v743
  %v831 = vunpack.c.l.b16 %v744
  %v832 = vunpack.c.h.b16 %v744
  %v833 = vunpack.c.l.b16 %v745
  %v834 = vunpack.c.h.b16 %v745
  %v835 = vunpack.c.l.b16 %v746
  %v836 = vunpack.c.h.b16 %v746
  %v837 = vunpack.c.l.b16 %v747
  %v838 = vunpack.c.h.b16 %v747
  %v839 = vunpack.c.l.b16 %v748
  %v840 = vunpack.c.h.b16 %v748
  %v841 = vunpack.c.l.b16 %v749
  %v842 = vunpack.c.h.b16 %v749
  %v843 = vunpack.c.l.b16 %v750
  %v844 = vunpack.c.h.b16 %v750
  %v845 = vunpack.c.l.b16 %v751
  %v846 = vunpack.c.h.b16 %v751
  %v847 = vunpack.c.l.b16 %v752
  %v848 = vunpack.c.h.b16 %v752
  %v849 = vunpack.c.l.b16 %v753
  %v850 = vunpack.c.h.b16 %v753
  %v851 = vunpack.c.l.b16 %v754
  %v852 = vunpack.c.h.b16 %v754
  %v853 = vunpack.c.l.b16 %v755
  %v854 = vunpack.c.h.b16 %v755
  %v855 = vunpack.c.l.b16 %v756
  %v856 = vunpack.c.h.b16 %v756
  %v857 = vunpack.c.l.b16 %v757
  %v858 = vunpack.c.h.b16 %v757
  %v859 = vunpack.c.l.b16 %v758
  %v860 = vunpack.c.h.b16 %v758
  %v861 = vunpack.c.l.b16 %v759
  %v862 = vunpack.c.h.b16 %v759
  %v863 = vunpack.c.l.b16 %v760
  %v864 = vunpack.c.h.b16 %v760
  %v865 = vunpack.c.l.b16 %v761
  %v866 = vunpack.c.h.b16 %v761
  %v867 = vunpack.c.l.b16 %v762
  %v868 = vunpack.c.h.b16 %v762
  %v869 = vunpack.c.l.b16 %v763
  %v870 = vunpack.c.h.b16 %v763
  %v871 = vunpack.c.l.b16 %v764
  %v872 = vunpack.c.h.b16 %v764
  %v873 = vpack.c.b16 %v811, %v809
  %v874 = vpack.c.b16 %v812, %v810
  %v875 = vpack.c.b16 %v815, %v813
  %v876 = vpack.c.b16 %v816, %v814
  %v877 = vpack.c.b16 %v819, %v817
  %v878 = vpack.c.b16 %v820, %v818
  %v879 = vpack.c.b16 %v823, %v821
  %v880 = vpack.c.b16 %v824, %v822
  %v881 = vpack.c.b16 %v827, %v825
  %v882 = vpack.c.b16 %v828, %v826
  %v883 = vpack.c.b16 %v831, %v829
  %v884 = vpack.c.b16 %v832, %v830
  %v885 = vpack.c.b16 %v835, %v833
  %v886 = vpack.c.b16 %v836, %v834
  %v887 = vpack.c.b16 %v839, %v837
  %v888 = vpack.c.b16 %v840, %v838
  %v889 = vpack.c.b16 %v843, %v841
  %v890 = vpack.c.b16 %v844, %v842
  %v891 = vpack.c.b16 %v847, %v845
  %v892 = vpack.c.b16 %v848, %v846
  %v893 = vpack.c.b16 %v851, %v849
  %v894 = vpack.c.b16 %v852, %v850
  %v895 = vpack.c.b16 %v855, %v853
  %v896 = vpack.c.b16 %v856, %v854
  %v897 = vpack.c.b16 %v859, %v857
  %v898 = vpack.c.b16 %v860, %v858
  %v899 = vpack.c.b16 %v863, %v861
  %v900 = vpack.c.b16 %v864, %v862
  %v901 = vpack.c.b16 %v867, %v865
  %v902 = vpack.c.b16 %v868, %v866
  %v903 = vpack.c.b16 %v871, %v869
  %v904 = vpack.c.b16 %v872, %v870
  %937 = vmatprep.subr.bf16.mxu0 %v874
  %938 = vmatpush1.bf16.msra.mxu0 %v873
  %939 = vmatprep.subr.bf16.mxu0 %v876
  %940 = vmatpush1.bf16.msra.mxu0 %v875
  %941 = vmatprep.subr.bf16.mxu0 %v878
  %942 = vmatpush1.bf16.msra.mxu0 %v877
  %943 = vmatprep.subr.bf16.mxu0 %v880
  %944 = vmatpush1.bf16.msra.mxu0 %v879
  %945 = vmatprep.subr.bf16.mxu0 %v882
  %946 = vmatpush1.bf16.msra.mxu0 %v881
  %947 = vmatprep.subr.bf16.mxu0 %v884
  %948 = vmatpush1.bf16.msra.mxu0 %v883
  %949 = vmatprep.subr.bf16.mxu0 %v886
  %950 = vmatpush1.bf16.msra.mxu0 %v885
  %951 = vmatprep.subr.bf16.mxu0 %v888
  %952 = vmatpush1.bf16.msra.mxu0 %v887
  %953 = vmatprep.subr.bf16.mxu0 %v890
  %954 = vmatpush1.bf16.msra.mxu0 %v889
  %955 = vmatprep.subr.bf16.mxu0 %v892
  %956 = vmatpush1.bf16.msra.mxu0 %v891
  %957 = vmatprep.subr.bf16.mxu0 %v894
  %958 = vmatpush1.bf16.msra.mxu0 %v893
  %959 = vmatprep.subr.bf16.mxu0 %v896
  %960 = vmatpush1.bf16.msra.mxu0 %v895
  %961 = vmatprep.subr.bf16.mxu0 %v898
  %962 = vmatpush1.bf16.msra.mxu0 %v897
  %963 = vmatprep.subr.bf16.mxu0 %v900
  %964 = vmatpush1.bf16.msra.mxu0 %v899
  %965 = vmatprep.subr.bf16.mxu0 %v902
  %966 = vmatpush1.bf16.msra.mxu0 %v901
  %967 = vmatprep.subr.bf16.mxu0 %v904
  %968 = vmatpush1.bf16.msra.mxu0 %v903
  %969 = vmatprep.mubr.bf16.mxu0 %v718
  %970 = vmatmul.mubr.bf16.gmra.mrb[0].mxu0 %v717
  %v971 = vpop.f32.mrb[0].mxu0
  %v972 = vadd.f32 %v770, %v971
  %v973 = vpop.f32.mrb[0].mxu0
  %v974 = vadd.f32 %v774, %v973
  %v975 = vpop.f32.mrb[0].mxu0
  %v976 = vadd.f32 %v770, %v975
  %v977 = vpop.f32.mrb[0].mxu0
  %v978 = vadd.f32 %v774, %v977
  %979 = vmatprep.mubr.bf16.mxu0 %v720
  %980 = vmatmul.mubr.bf16.gmra.mrb[0].mxu0 %v719
  %v981 = vpop.f32.mrb[0].mxu0
  %v982 = vadd.f32 %v770, %v981
  %v983 = vpop.f32.mrb[0].mxu0
  %v984 = vadd.f32 %v774, %v983
  %v985 = vpop.f32.mrb[0].mxu0
  %v986 = vadd.f32 %v770, %v985
  %v987 = vpop.f32.mrb[0].mxu0
  %v988 = vadd.f32 %v774, %v987
  %989 = vmatprep.mubr.bf16.mxu0 %v722
  %990 = vmatmul.mubr.bf16.gmra.mrb[0].mxu0 %v721
  %v991 = vpop.f32.mrb[0].mxu0
  %v992 = vadd.f32 %v770, %v991
  %v993 = vpop.f32.mrb[0].mxu0
  %v994 = vadd.f32 %v774, %v993
  %v995 = vpop.f32.mrb[0].mxu0
  %v996 = vadd.f32 %v770, %v995
  %v997 = vpop.f32.mrb[0].mxu0
  %v998 = vadd.f32 %v774, %v997
  %999 = vmatprep.mubr.bf16.mxu0 %v724
  %1000 = vmatmul.mubr.bf16.gmra.mrb[0].mxu0 %v723
  %v1001 = vpop.f32.mrb[0].mxu0
  %v1002 = vadd.f32 %v770, %v1001
  %v1003 = vpop.f32.mrb[0].mxu0
  %v1004 = vadd.f32 %v774, %v1003
  %v1005 = vpop.f32.mrb[0].mxu0
  %v1006 = vadd.f32 %v770, %v1005
  %v1007 = vpop.f32.mrb[0].mxu0
  %v1008 = vadd.f32 %v774, %v1007
  %1009 = vmatprep.mubr.bf16.mxu0 %v726
  %1010 = vmatmul.mubr.bf16.gmra.mrb[0].mxu0 %v725
  %v1011 = vpop.f32.mrb[0].mxu0
  %v1012 = vadd.f32 %v770, %v1011
  %v1013 = vpop.f32.mrb[0].mxu0
  %v1014 = vadd.f32 %v774, %v1013
  %v1015 = vpop.f32.mrb[0].mxu0
  %v1016 = vadd.f32 %v770, %v1015
  %v1017 = vpop.f32.mrb[0].mxu0
  %v1018 = vadd.f32 %v774, %v1017
  %1019 = vmatprep.mubr.bf16.mxu0 %v728
  %1020 = vmatmul.mubr.bf16.gmra.mrb[0].mxu0 %v727
  %v1021 = vpop.f32.mrb[0].mxu0
  %v1022 = vadd.f32 %v770, %v1021
  %v1023 = vpop.f32.mrb[0].mxu0
  %v1024 = vadd.f32 %v774, %v1023
  %v1025 = vpop.f32.mrb[0].mxu0
  %v1026 = vadd.f32 %v770, %v1025
  %v1027 = vpop.f32.mrb[0].mxu0
  %v1028 = vadd.f32 %v774, %v1027
  %1029 = vmatprep.mubr.bf16.mxu0 %v730
  %1030 = vmatmul.mubr.bf16.gmra.mrb[0].mxu0 %v729
  %v1031 = vpop.f32.mrb[0].mxu0
  %v1032 = vadd.f32 %v770, %v1031
  %v1033 = vpop.f32.mrb[0].mxu0
  %v1034 = vadd.f32 %v774, %v1033
  %v1035 = vpop.f32.mrb[0].mxu0
  %v1036 = vadd.f32 %v770, %v1035
  %v1037 = vpop.f32.mrb[0].mxu0
  %v1038 = vadd.f32 %v774, %v1037
  %1039 = vmatprep.mubr.bf16.mxu0 %v732
  %1040 = vmatmul.mubr.bf16.gmra.mrb[0].mxu0 %v731
  %v1041 = vpop.f32.mrb[0].mxu0
  %v1042 = vadd.f32 %v770, %v1041
  %v1043 = vpop.f32.mrb[0].mxu0
  %v1044 = vadd.f32 %v774, %v1043
  %v1045 = vpop.f32.mrb[0].mxu0
  %v1046 = vadd.f32 %v770, %v1045
  %v1047 = vpop.f32.mrb[0].mxu0
  %v1048 = vadd.f32 %v774, %v1047
  %1049 = vdwg.mxu0
  %v1050 = vmax.f32 %v972, 0.0
  %v1051 = vmax.f32 %v974, 0.0
  %v1052 = vmax.f32 %v976, 0.0
  %v1053 = vmax.f32 %v978, 0.0
  %v1054 = vmax.f32 %v982, 0.0
  %v1055 = vmax.f32 %v984, 0.0
  %v1056 = vmax.f32 %v986, 0.0
  %v1057 = vmax.f32 %v988, 0.0
  %v1058 = vmax.f32 %v992, 0.0
  %v1059 = vmax.f32 %v994, 0.0
  %v1060 = vmax.f32 %v996, 0.0
  %v1061 = vmax.f32 %v998, 0.0
  %v1062 = vmax.f32 %v1002, 0.0
  %v1063 = vmax.f32 %v1004, 0.0
  %v1064 = vmax.f32 %v1006, 0.0
  %v1065 = vmax.f32 %v1008, 0.0
  %v1066 = vmax.f32 %v1012, 0.0
  %v1067 = vmax.f32 %v1014, 0.0
  %v1068 = vmax.f32 %v1016, 0.0
  %v1069 = vmax.f32 %v1018, 0.0
  %v1070 = vmax.f32 %v1022, 0.0
  %v1071 = vmax.f32 %v1024, 0.0
  %v1072 = vmax.f32 %v1026, 0.0
  %v1073 = vmax.f32 %v1028, 0.0
  %v1074 = vmax.f32 %v1032, 0.0
  %v1075 = vmax.f32 %v1034, 0.0
  %v1076 = vmax.f32 %v1036, 0.0
  %v1077 = vmax.f32 %v1038, 0.0
  %v1078 = vmax.f32 %v1042, 0.0
  %v1079 = vmax.f32 %v1044, 0.0
  %v1080 = vmax.f32 %v1046, 0.0
  %v1081 = vmax.f32 %v1048, 0.0
  %v1082 = vld [vmem:[%s7] sm:$0x3]
  %v1084 = vlaneseq
  %v1085 = vshrl.u32 %v1084, 7
  %v1086 = vsub.s32 0, %v1085
  %v1087 = vrot.slane %v1082, %v1086
  %v1088 = vlaneseq
  %v1089 = vshrl.u32 %v1088, 7
  %v1090 = vsub.s32 1, %v1089
  %v1091 = vrot.slane %v1082, %v1090
  %v1094 = vmul.f32 %v1050, %v1087
  %v1095 = vmul.f32 %v1051, %v1091
  %v1096 = vmul.f32 %v1052, %v1087
  %v1097 = vmul.f32 %v1053, %v1091
  %v1098 = vmul.f32 %v1054, %v1087
  %v1099 = vmul.f32 %v1055, %v1091
  %v1100 = vmul.f32 %v1056, %v1087
  %v1101 = vmul.f32 %v1057, %v1091
  %v1102 = vmul.f32 %v1058, %v1087
  %v1103 = vmul.f32 %v1059, %v1091
  %v1104 = vmul.f32 %v1060, %v1087
  %v1105 = vmul.f32 %v1061, %v1091
  %v1106 = vmul.f32 %v1062, %v1087
  %v1107 = vmul.f32 %v1063, %v1091
  %v1108 = vmul.f32 %v1064, %v1087
  %v1109 = vmul.f32 %v1065, %v1091
  %v1110 = vmul.f32 %v1066, %v1087
  %v1111 = vmul.f32 %v1067, %v1091
  %v1112 = vmul.f32 %v1068, %v1087
  %v1113 = vmul.f32 %v1069, %v1091
  %v1114 = vmul.f32 %v1070, %v1087
  %v1115 = vmul.f32 %v1071, %v1091
  %v1116 = vmul.f32 %v1072, %v1087
  %v1117 = vmul.f32 %v1073, %v1091
  %v1118 = vmul.f32 %v1074, %v1087
  %v1119 = vmul.f32 %v1075, %v1091
  %v1120 = vmul.f32 %v1076, %v1087
  %v1121 = vmul.f32 %v1077, %v1091
  %v1122 = vmul.f32 %v1078, %v1087
  %v1123 = vmul.f32 %v1079, %v1091
  %v1124 = vmul.f32 %v1080, %v1087
  %v1125 = vmul.f32 %v1081, %v1091
  %v1126 = vadd.f32 %v1094, %v1095
  %1127 = vadd.xlane.f32.xlu0 %v1126
  %v1128 = vpop.xlane.xlu0 %1127
  %v1129 = vadd.f32 %v1096, %v1097
  %1130 = vadd.xlane.f32.xlu0 %v1129
  %v1131 = vpop.xlane.xlu0 %1130
  %v1132 = vadd.f32 %v1098, %v1099
  %1133 = vadd.xlane.f32.xlu0 %v1132
  %v1134 = vpop.xlane.xlu0 %1133
  %v1135 = vadd.f32 %v1100, %v1101
  %1136 = vadd.xlane.f32.xlu0 %v1135
  %v1137 = vpop.xlane.xlu0 %1136
  %v1138 = vadd.f32 %v1102, %v1103
  %1139 = vadd.xlane.f32.xlu0 %v1138
  %v1140 = vpop.xlane.xlu0 %1139
  %v1141 = vadd.f32 %v1104, %v1105
  %1142 = vadd.xlane.f32.xlu0 %v1141
  %v1143 = vpop.xlane.xlu0 %1142
  %v1144 = vadd.f32 %v1106, %v1107
  %1145 = vadd.xlane.f32.xlu0 %v1144
  %v1146 = vpop.xlane.xlu0 %1145
  %v1147 = vadd.f32 %v1108, %v1109
  %1148 = vadd.xlane.f32.xlu0 %v1147
  %v1149 = vpop.xlane.xlu0 %1148
  %v1150 = vadd.f32 %v1110, %v1111
  %1151 = vadd.xlane.f32.xlu0 %v1150
  %v1152 = vpop.xlane.xlu0 %1151
  %v1153 = vadd.f32 %v1112, %v1113
  %1154 = vadd.xlane.f32.xlu0 %v1153
  %v1155 = vpop.xlane.xlu0 %1154
  %v1156 = vadd.f32 %v1114, %v1115
  %1157 = vadd.xlane.f32.xlu0 %v1156
  %v1158 = vpop.xlane.xlu0 %1157
  %v1159 = vadd.f32 %v1116, %v1117
  %1160 = vadd.xlane.f32.xlu0 %v1159
  %v1161 = vpop.xlane.xlu0 %1160
  %v1162 = vadd.f32 %v1118, %v1119
  %1163 = vadd.xlane.f32.xlu0 %v1162
  %v1164 = vpop.xlane.xlu0 %1163
  %v1165 = vadd.f32 %v1120, %v1121
  %1166 = vadd.xlane.f32.xlu0 %v1165
  %v1167 = vpop.xlane.xlu0 %1166
  %v1168 = vadd.f32 %v1122, %v1123
  %1169 = vadd.xlane.f32.xlu0 %v1168
  %v1170 = vpop.xlane.xlu0 %1169
  %v1171 = vadd.f32 %v1124, %v1125
  %1172 = vadd.xlane.f32.xlu0 %v1171
  %v1173 = vpop.xlane.xlu0 %1172
  %v1174 = vld [vmem:[#allocation2] sm:$0x1]
  %v1176 = vlaneseq
  %v1177 = vshrl.u32 %v1176, 7
  %v1178 = vsub.s32 0, %v1177
  %v1179 = vrot.slane %v1174, %v1178
  %v1181 = vadd.f32 %v1128, %v1179
  %v1182 = vadd.f32 %v1131, %v1179
  %v1183 = vadd.f32 %v1134, %v1179
  %v1184 = vadd.f32 %v1137, %v1179
  %v1185 = vadd.f32 %v1140, %v1179
  %v1186 = vadd.f32 %v1143, %v1179
  %v1187 = vadd.f32 %v1146, %v1179
  %v1188 = vadd.f32 %v1149, %v1179
  %v1189 = vadd.f32 %v1152, %v1179
  %v1190 = vadd.f32 %v1155, %v1179
  %v1191 = vadd.f32 %v1158, %v1179
  %v1192 = vadd.f32 %v1161, %v1179
  %v1193 = vadd.f32 %v1164, %v1179
  %v1194 = vadd.f32 %v1167, %v1179
  %v1195 = vadd.f32 %v1170, %v1179
  %v1196 = vadd.f32 %v1173, %v1179
  %vm1197 = vcmask 7168
  %1198 = vst.msk [vmem:[%s9] sm:$0xff] %vm1197, %v1181
  %1199 = vst.msk [vmem:[%s9 + $0x8] sm:$0xff] %vm1197, %v1182
  %1200 = vst.msk [vmem:[%s9 + $0x10] sm:$0xff] %vm1197, %v1183
  %1201 = vst.msk [vmem:[%s9 + $0x18] sm:$0xff] %vm1197, %v1184
  %1202 = vst.msk [vmem:[%s9 + $0x20] sm:$0xff] %vm1197, %v1185
  %1203 = vst.msk [vmem:[%s9 + $0x28] sm:$0xff] %vm1197, %v1186
  %1204 = vst.msk [vmem:[%s9 + $0x30] sm:$0xff] %vm1197, %v1187
  %1205 = vst.msk [vmem:[%s9 + $0x38] sm:$0xff] %vm1197, %v1188
  %1206 = vst.msk [vmem:[%s9 + $0x40] sm:$0xff] %vm1197, %v1189
  %1207 = vst.msk [vmem:[%s9 + $0x48] sm:$0xff] %vm1197, %v1190
  %1208 = vst.msk [vmem:[%s9 + $0x50] sm:$0xff] %vm1197, %v1191
  %1209 = vst.msk [vmem:[%s9 + $0x58] sm:$0xff] %vm1197, %v1192
  %1210 = vst.msk [vmem:[%s9 + $0x60] sm:$0xff] %vm1197, %v1193
  %1211 = vst.msk [vmem:[%s9 + $0x68] sm:$0xff] %vm1197, %v1194
  %1212 = vst.msk [vmem:[%s9 + $0x70] sm:$0xff] %vm1197, %v1195
  %1213 = vst.msk [vmem:[%s9 + $0x78] sm:$0xff] %vm1197, %v1196
  // Predicated region
  $region38: #{critic_forward.1} parent=0 // pred_check
    _
  $region39: #{critic_forward.1} parent=0 // pred_check_branch
    %1215 = sbr.rel (0) target = $region41
  $region40: #{critic_forward.1} parent=0 // pred_region
    _
  $region41: #{critic_forward.1} parent=0 // pred_fallthru
    _
  // Predicated region
  $region42: #{critic_forward.1} parent=0 // pred_check
    _
  $region43: #{critic_forward.1} parent=0 // pred_check_branch
    %1217 = sbr.rel (0) target = $region45
  $region44: #{critic_forward.1} parent=0 // pred_region
    _
  $region45: #{critic_forward.1} parent=0 // pred_fallthru
    _

</llo_original>
